<compile_context>
chip_gen: v5e
topology: v5e:2x2
jax: 0.10.0
libtpu: 0.0.40
codegen_flags: <defaults>
</compile_context>

<pallas_src>
import functools

import jax
import jax.numpy as jnp
from jax.experimental import pallas as pl
from jax.experimental.pallas import tpu as pltpu

C_IN = 64            # input channels
KD = KH = KW = 3     # conv1 kernel (valid padding -> 1x1x1 spatial output)
FLAT_IN = C_IN * KD * KH * KW   # 1728
C1, C2, C3 = 96, 128, 64
BN_EPS = 1e-5


def localvoxel_kernel(x_ref, w1_ref, w2_ref, w3_ref, sh_ref, o_ref):
    # x_ref : (TB, 1728) tile of flattened samples (channels-major flatten,
    #          matching the permuted torch layout)
    # wN_ref: (Cin, Cout) weights with BN scale already folded in
    # sh_ref: (3, 128) packed per-channel shifts (row n = layer n, zero-padded)
    # o_ref : (TB, 64)
    x = x_ref[...]

    h = jnp.dot(x, w1_ref[...], preferred_element_type=jnp.float32)
    h = jnp.maximum(h + sh_ref[0:1, 0:C1], 0.0)

    h = jnp.dot(h, w2_ref[...], preferred_element_type=jnp.float32)
    h = jnp.maximum(h + sh_ref[1:2, 0:C2], 0.0)

    h = jnp.dot(h, w3_ref[...], preferred_element_type=jnp.float32)
    o_ref[...] = jnp.maximum(h + sh_ref[2:3, 0:C3], 0.0)


def _fold_bn_into_weight(w_oc_ic, conv_b, gamma, beta, mean, var, eps=BN_EPS):
    """Fold conv bias + BatchNorm1d/3d (eval) into the weight and a shift.

    w_oc_ic: (Cout, Cin_flat) torch-layout weight.
    Returns w_folded (Cin_flat, Cout) and shift (Cout,) such that
      relu(bn(x @ W.T + b)) == relu(x @ w_folded + shift).
    """
    scale = gamma / jnp.sqrt(var + eps)                 # (Cout,)
    w_folded = (w_oc_ic * scale[:, None]).T             # (Cin_flat, Cout)
    shift = (conv_b - mean) * scale + beta              # (Cout,)
    return w_folded.astype(jnp.float32), shift.astype(jnp.float32)


def _round_up(x, m):
    return ((x + m - 1) // m) * m


@functools.partial(jax.jit, static_argnames=("tile_b",))
def localvoxelnet_forward(x, params, tile_b=512):
    """x: (B, 3, 3, 3, 64) float input (torch forward permutes to NCDHW)."""
    B = x.shape[0]

    (w1, b1, g1, be1, m1, v1,
     w2, b2, g2, be2, m2, v2,
     w3, b3, g3, be3, m3, v3) = params

    # Match torch: permute to (B, C, D, H, W), then flatten (valid 3x3x3 conv
    # over a 3x3x3 volume == full contraction over C*D*H*W).
    xf = jnp.transpose(x, (0, 4, 1, 2, 3)).reshape(B, FLAT_IN)
    xf = xf.astype(jnp.float32)

    w1p, sh1 = _fold_bn_into_weight(w1.reshape(C1, FLAT_IN), b1, g1, be1, m1, v1)
    w2p, sh2 = _fold_bn_into_weight(w2.reshape(C2, C1), b2, g2, be2, m2, v2)
    w3p, sh3 = _fold_bn_into_weight(w3.reshape(C3, C2), b3, g3, be3, m3, v3)

    # Pack the three shift vectors into a single lane-padded slab.
    shifts = jnp.zeros((3, 128), jnp.float32)
    shifts = shifts.at[0, :C1].set(sh1)
    shifts = shifts.at[1, :C2].set(sh2)
    shifts = shifts.at[2, :C3].set(sh3)

    # Row tile: as large as requested but never larger than the (8-rounded)
    # batch; always a multiple of 8 (sublane requirement).
    tb = min(int(tile_b), _round_up(B, 8))
    tb = max(8, (tb // 8) * 8)
    rows_pad = pl.cdiv(B, tb) * tb
    if rows_pad != B:
        xf = jnp.pad(xf, ((0, rows_pad - B), (0, 0)))
    grid = (rows_pad // tb,)

    full = lambda i: (0, 0)   # weights / shifts: same resident block each step

    out = pl.pallas_call(
        localvoxel_kernel,
        out_shape=jax.ShapeDtypeStruct((rows_pad, C3), jnp.float32),
        grid_spec=pltpu.PrefetchScalarGridSpec(
            num_scalar_prefetch=0,
            grid=grid,
            in_specs=[
                pl.BlockSpec((tb, FLAT_IN), lambda i: (i, 0)),
                pl.BlockSpec((FLAT_IN, C1), full),
                pl.BlockSpec((C1, C2), full),
                pl.BlockSpec((C2, C3), full),
                pl.BlockSpec((3, 128), full),
            ],
            out_specs=pl.BlockSpec((tb, C3), lambda i: (i, 0)),
        ),
        compiler_params=pltpu.CompilerParams(
            dimension_semantics=("parallel",)),
    )(xf, w1p, w2p, w3p, shifts)

    return out[:B]


def init_params(key):
    """Deterministic synthetic parameters (shapes match the torch module)."""
    ks = jax.random.split(key, 18)

    def layer(k0, k1, k2, k3, k4, k5, cout, cin, kd, kh, kw):
        fan_in = cin * kd * kh * kw
        bound = 1.0 / jnp.sqrt(fan_in)
        w = jax.random.uniform(k0, (cout, cin, kd, kh, kw), jnp.float32,
                               -bound, bound)
        b = jax.random.uniform(k1, (cout,), jnp.float32, -bound, bound)
        gamma = jax.random.uniform(k2, (cout,), jnp.float32, 0.5, 1.5)
        beta = 0.1 * jax.random.normal(k3, (cout,), jnp.float32)
        mean = 0.1 * jax.random.normal(k4, (cout,), jnp.float32)
        var = jax.random.uniform(k5, (cout,), jnp.float32, 0.5, 1.5)
        return w, b, gamma, beta, mean, var

    p1 = layer(*ks[0:6], C1, C_IN, KD, KH, KW)
    p2 = layer(*ks[6:12], C2, C1, 1, 1, 1)
    p3 = layer(*ks[12:18], C3, C2, 1, 1, 1)
    return (*p1, *p2, *p3)


def reference_forward(x, params):
    """Pure-JAX reference mirroring the torch forward (BN in eval mode)."""
    (w1, b1, g1, be1, m1, v1,
     w2, b2, g2, be2, m2, v2,
     w3, b3, g3, be3, m3, v3) = params

    def bn_relu(y, g, be, m, v):
        return jnp.maximum(g * (y - m) / jnp.sqrt(v + BN_EPS) + be, 0.0)

    xc = jnp.transpose(x, (0, 4, 1, 2, 3)).astype(jnp.float32)  # (B,64,3,3,3)
    hp = jax.lax.Precision.HIGHEST

    y = jnp.einsum('bcdhw,ocdhw->bo', xc, w1, precision=hp) + b1   # conv1 valid
    y = bn_relu(y, g1, be1, m1, v1)
    y = jnp.dot(y, w2.reshape(C2, C1).T, precision=hp) + b2        # 1x1x1 conv2
    y = bn_relu(y, g2, be2, m2, v2)
    y = jnp.dot(y, w3.reshape(C3, C2).T, precision=hp) + b3        # 1x1x1 conv3
    y = bn_relu(y, g3, be3, m3, v3)
    return y                                                       # (B, 64)


if __name__ == "__main__":
    key = jax.random.PRNGKey(0)
    k_in, k_par = jax.random.split(key)

    B = 12  # deliberately not a multiple of 8 to exercise the padded tail
    in_vox = jax.random.normal(k_in, (B, 3, 3, 3, C_IN), jnp.float32)
    params = init_params(k_par)

    out = localvoxelnet_forward(in_vox, params)
    out = jax.block_until_ready(out)

    ref = reference_forward(in_vox, params)
    assert out.shape == (B, C3), out.shape
    assert jnp.allclose(out, ref, atol=2e-3, rtol=2e-3), float(
        jnp.max(jnp.abs(out - ref)))

    print("KERNEL_OK")
</pallas_src>

<mosaic_0001>
module attributes {stable_mosaic.version = 11 : i64} {
  func.func @localvoxel_kernel(%arg0: i32, %arg1: memref<16x1728xf32, #tpu.memory_space<vmem>>, %arg2: memref<1728x96xf32, #tpu.memory_space<vmem>>, %arg3: memref<96x128xf32, #tpu.memory_space<vmem>>, %arg4: memref<128x64xf32, #tpu.memory_space<vmem>>, %arg5: memref<3x128xf32, #tpu.memory_space<vmem>>, %arg6: memref<16x64xf32, #tpu.memory_space<vmem>>) attributes {dimension_semantics = [#tpu.dimension_semantics<parallel>], iteration_bounds = array<i64: 1>, scalar_prefetch = 0 : i64, scratch_operands = 0 : i64, tpu.core_type = #tpu.core_type<tc>, window_params = [{transform_indices = @transform_0, window_bounds = array<i64: 16, 1728>}, {pipeline_mode = #tpu.pipeline_mode<synchronous>, transform_indices = @transform_1, window_bounds = array<i64: 1728, 96>}, {pipeline_mode = #tpu.pipeline_mode<synchronous>, transform_indices = @transform_2, window_bounds = array<i64: 96, 128>}, {pipeline_mode = #tpu.pipeline_mode<synchronous>, transform_indices = @transform_3, window_bounds = array<i64: 128, 64>}, {pipeline_mode = #tpu.pipeline_mode<synchronous>, transform_indices = @transform_4, window_bounds = array<i64: 3, 128>}, {transform_indices = @transform_5, window_bounds = array<i64: 16, 64>}]} {
    %c0 = arith.constant 0 : index
    %c0_0 = arith.constant 0 : index
    %0 = vector.load %arg1[%c0, %c0_0] : memref<16x1728xf32, #tpu.memory_space<vmem>>, vector<16x1728xf32>
    %c0_1 = arith.constant 0 : index
    %c0_2 = arith.constant 0 : index
    %1 = vector.load %arg2[%c0_1, %c0_2] : memref<1728x96xf32, #tpu.memory_space<vmem>>, vector<1728x96xf32>
    %cst = arith.constant dense<0.000000e+00> : vector<16x96xf32>
    %2 = tpu.matmul %0, %1, %cst {dimension_numbers = #tpu.dot_dimension_numbers<[1], [0], [0], [1], [0, 0, 1, 1], [], []>} : vector<16x1728xf32>, vector<1728x96xf32>, vector<16x96xf32> -> vector<16x96xf32>
    %c0_3 = arith.constant 0 : index
    %c0_4 = arith.constant 0 : index
    %3 = vector.load %arg5[%c0_3, %c0_4] : memref<3x128xf32, #tpu.memory_space<vmem>>, vector<1x96xf32>
    %4 = vector.broadcast %3 : vector<1x96xf32> to vector<16x96xf32>
    %5 = arith.addf %2, %4 : vector<16x96xf32>
    %cst_5 = arith.constant 0.000000e+00 : f32
    %6 = vector.broadcast %cst_5 : f32 to vector<16x96xf32>
    %7 = arith.maximumf %5, %6 : vector<16x96xf32>
    %c0_6 = arith.constant 0 : index
    %c0_7 = arith.constant 0 : index
    %8 = vector.load %arg3[%c0_6, %c0_7] : memref<96x128xf32, #tpu.memory_space<vmem>>, vector<96x128xf32>
    %cst_8 = arith.constant dense<0.000000e+00> : vector<16x128xf32>
    %9 = tpu.matmul %7, %8, %cst_8 {dimension_numbers = #tpu.dot_dimension_numbers<[1], [0], [0], [1], [0, 0, 1, 1], [], []>} : vector<16x96xf32>, vector<96x128xf32>, vector<16x128xf32> -> vector<16x128xf32>
    %c1 = arith.constant 1 : index
    %c0_9 = arith.constant 0 : index
    %10 = vector.load %arg5[%c1, %c0_9] : memref<3x128xf32, #tpu.memory_space<vmem>>, vector<1x128xf32>
    %11 = vector.broadcast %10 : vector<1x128xf32> to vector<16x128xf32>
    %12 = arith.addf %9, %11 : vector<16x128xf32>
    %cst_10 = arith.constant 0.000000e+00 : f32
    %13 = vector.broadcast %cst_10 : f32 to vector<16x128xf32>
    %14 = arith.maximumf %12, %13 : vector<16x128xf32>
    %c0_11 = arith.constant 0 : index
    %c0_12 = arith.constant 0 : index
    %15 = vector.load %arg4[%c0_11, %c0_12] : memref<128x64xf32, #tpu.memory_space<vmem>>, vector<128x64xf32>
    %cst_13 = arith.constant dense<0.000000e+00> : vector<16x64xf32>
    %16 = tpu.matmul %14, %15, %cst_13 {dimension_numbers = #tpu.dot_dimension_numbers<[1], [0], [0], [1], [0, 0, 1, 1], [], []>} : vector<16x128xf32>, vector<128x64xf32>, vector<16x64xf32> -> vector<16x64xf32>
    %c2 = arith.constant 2 : index
    %c0_14 = arith.constant 0 : index
    %17 = vector.load %arg5[%c2, %c0_14] : memref<3x128xf32, #tpu.memory_space<vmem>>, vector<1x64xf32>
    %18 = vector.broadcast %17 : vector<1x64xf32> to vector<16x64xf32>
    %19 = arith.addf %16, %18 : vector<16x64xf32>
    %cst_15 = arith.constant 0.000000e+00 : f32
    %20 = vector.broadcast %cst_15 : f32 to vector<16x64xf32>
    %21 = arith.maximumf %19, %20 : vector<16x64xf32>
    %c0_16 = arith.constant 0 : index
    %c0_17 = arith.constant 0 : index
    %22 = vector.load %arg6[%c0_16, %c0_17] : memref<16x64xf32, #tpu.memory_space<vmem>>, vector<16x64xf32>
    tpu.vector_store %arg6[%c0_16, %c0_17], %21 {strides = array<i32>} : memref<16x64xf32, #tpu.memory_space<vmem>>, vector<16x64xf32>,
    return
  }
  func.func @transform_0(%arg0: i32) -> (i32, i32) {
    %c0_i32 = arith.constant 0 : i32
    %c0_i32_0 = arith.constant 0 : i32
    return %arg0, %c0_i32 : i32, i32
  }
  func.func @transform_1(%arg0: i32) -> (i32, i32) {
    %c0_i32 = arith.constant 0 : i32
    %c0_i32_0 = arith.constant 0 : i32
    %c0_i32_1 = arith.constant 0 : i32
    return %c0_i32, %c0_i32_0 : i32, i32
  }
  func.func @transform_2(%arg0: i32) -> (i32, i32) {
    %c0_i32 = arith.constant 0 : i32
    %c0_i32_0 = arith.constant 0 : i32
    %c0_i32_1 = arith.constant 0 : i32
    return %c0_i32, %c0_i32_0 : i32, i32
  }
  func.func @transform_3(%arg0: i32) -> (i32, i32) {
    %c0_i32 = arith.constant 0 : i32
    %c0_i32_0 = arith.constant 0 : i32
    %c0_i32_1 = arith.constant 0 : i32
    return %c0_i32, %c0_i32_0 : i32, i32
  }
  func.func @transform_4(%arg0: i32) -> (i32, i32) {
    %c0_i32 = arith.constant 0 : i32
    %c0_i32_0 = arith.constant 0 : i32
    %c0_i32_1 = arith.constant 0 : i32
    return %c0_i32, %c0_i32_0 : i32, i32
  }
  func.func @transform_5(%arg0: i32) -> (i32, i32) {
    %c0_i32 = arith.constant 0 : i32
    %c0_i32_0 = arith.constant 0 : i32
    return %arg0, %c0_i32 : i32, i32
  }
}

</mosaic_0001>

<llo_original>
// kernel: localvoxelnet_forward.1
$region0: #{localvoxelnet_forward.1}
  #allocation0 [shape = 'u32[]', space=smem, size = 0x4, offset = 0x4, fixed_abs, tag = 'smem constant byte address 0x4 - core index']
  #allocation1 [shape = 'u32[72,128]{1,0:T(1,128)}', space=vmem, size = 0x9000, scoped, tag = 'internal scratch']
  %s0 = inlined_call_operand.vmem [shape: f32[16,1728], index: 0, kind: input, shape index: {}]
  %s1 = inlined_call_operand.vmem [shape: f32[1728,96], index: 1, kind: input, shape index: {}]
  %s2 = inlined_call_operand.vmem [shape: f32[96,128], index: 2, kind: input, shape index: {}]
  %s3 = inlined_call_operand.vmem [shape: f32[128,64], index: 3, kind: input, shape index: {}]
  %s4 = inlined_call_operand.vmem [shape: f32[3,128], index: 4, kind: input, shape index: {}]
  %s5 = inlined_call_operand.hbm [shape: f32[16,64], index: 5, kind: output, shape index: {}]
  %s6 = sld [smem:[#allocation0]]
  $region30: #{localvoxelnet_forward.1} parent=0
    _
  %s8 = ssub.s32 1, %s6
  %s9 = scalar_select 0, %s8, %s6
  $region1: #{localvoxelnet_forward.1} parent=0
    #allocation2 [shape = 'u8[8192]{0}', space=vmem, size = 0x2000, scoped, tag = 'output window, operand 0, single buffered']
    #allocation3 [shape = 's32[1]{0}', space=sflag, size = 0x4, scoped, tag = 'scoped memory for localvoxelnet_forward.1']
    %10 = vsyncpa [#allocation3], 0
    // Predicated region
    $region2: #{localvoxelnet_forward.1} parent=1 // pred_check
      _
    $region3: #{localvoxelnet_forward.1} parent=1 // pred_check_branch
      %12 = sbr.rel (0) target = $region5
    $region4: #{localvoxelnet_forward.1} parent=1 // pred_region
      _
    $region5: #{localvoxelnet_forward.1} parent=1 // pred_fallthru
      _
    // Predicated region
    $region6: #{localvoxelnet_forward.1} parent=1 // pred_check
      _
    $region7: #{localvoxelnet_forward.1} parent=1 // pred_check_branch
      %14 = sbr.rel (0) target = $region9
    $region8: #{localvoxelnet_forward.1} parent=1 // pred_region
      _
    $region9: #{localvoxelnet_forward.1} parent=1 // pred_fallthru
      _
    // Predicated region
    $region10: #{localvoxelnet_forward.1} parent=1 // pred_check
      _
    $region11: #{localvoxelnet_forward.1} parent=1 // pred_check_branch
      %16 = sbr.rel (0) target = $region13
    $region12: #{localvoxelnet_forward.1} parent=1 // pred_region
      _
    $region13: #{localvoxelnet_forward.1} parent=1 // pred_fallthru
      _
    // Predicated region
    $region14: #{localvoxelnet_forward.1} parent=1 // pred_check
      _
    $region15: #{localvoxelnet_forward.1} parent=1 // pred_check_branch
      %18 = sbr.rel (0) target = $region17
    $region16: #{localvoxelnet_forward.1} parent=1 // pred_region
      _
    $region17: #{localvoxelnet_forward.1} parent=1 // pred_fallthru
      _
    // Predicated region
    $region18: #{localvoxelnet_forward.1} parent=1 // pred_check
      _
    $region19: #{localvoxelnet_forward.1} parent=1 // pred_check_branch
      %20 = sbr.rel (0) target = $region21
    $region20: #{localvoxelnet_forward.1} parent=1 // pred_region
      _
    $region21: #{localvoxelnet_forward.1} parent=1 // pred_fallthru
      _
    %v21 = vld [vmem:[%s0] sm:$0xff]
    %v22 = vld [vmem:[%s0 + $0x8] sm:$0xff]
    %v23 = vld [vmem:[%s0 + $0x10] sm:$0xff]
    %v24 = vld [vmem:[%s0 + $0x18] sm:$0xff]
    %v25 = vld [vmem:[%s0 + $0x20] sm:$0xff]
    %v26 = vld [vmem:[%s0 + $0x28] sm:$0xff]
    %v27 = vld [vmem:[%s0 + $0x30] sm:$0xff]
    %v28 = vld [vmem:[%s0 + $0x38] sm:$0xff]
    %v29 = vld [vmem:[%s0 + $0x40] sm:$0xff]
    %v30 = vld [vmem:[%s0 + $0x48] sm:$0xff]
    %v31 = vld [vmem:[%s0 + $0x50] sm:$0xff]
    %v32 = vld [vmem:[%s0 + $0x58] sm:$0xff]
    %v33 = vld [vmem:[%s0 + $0x60] sm:$0xff]
    %v34 = vld [vmem:[%s0 + $0x68] sm:$0xff]
    %v35 = vld [vmem:[%s0 + $0x70] sm:$0xff]
    %v36 = vld [vmem:[%s0 + $0x78] sm:$0xff]
    %v37 = vld [vmem:[%s0 + $0x80] sm:$0xff]
    %v38 = vld [vmem:[%s0 + $0x88] sm:$0xff]
    %v39 = vld [vmem:[%s0 + $0x90] sm:$0xff]
    %v40 = vld [vmem:[%s0 + $0x98] sm:$0xff]
    %v41 = vld [vmem:[%s0 + $0xa0] sm:$0xff]
    %v42 = vld [vmem:[%s0 + $0xa8] sm:$0xff]
    %v43 = vld [vmem:[%s0 + $0xb0] sm:$0xff]
    %v44 = vld [vmem:[%s0 + $0xb8] sm:$0xff]
    %v45 = vld [vmem:[%s0 + $0xc0] sm:$0xff]
    %v46 = vld [vmem:[%s0 + $0xc8] sm:$0xff]
    %v47 = vld [vmem:[%s0 + $0xd0] sm:$0xff]
    %v48 = vld [vmem:[%s0 + $0xd8] sm:$0xff]
    %v49 = vld [vmem:[%s1] sm:$0xff]
    %v50 = vld [vmem:[%s1 + $0x8] sm:$0xff]
    %v51 = vld [vmem:[%s1 + $0x10] sm:$0xff]
    %v52 = vld [vmem:[%s1 + $0x18] sm:$0xff]
    %v53 = vld [vmem:[%s1 + $0x20] sm:$0xff]
    %v54 = vld [vmem:[%s1 + $0x28] sm:$0xff]
    %v55 = vld [vmem:[%s1 + $0x30] sm:$0xff]
    %v56 = vld [vmem:[%s1 + $0x38] sm:$0xff]
    %v57 = vld [vmem:[%s1 + $0x40] sm:$0xff]
    %v58 = vld [vmem:[%s1 + $0x48] sm:$0xff]
    %v59 = vld [vmem:[%s1 + $0x50] sm:$0xff]
    %v60 = vld [vmem:[%s1 + $0x58] sm:$0xff]
    %v61 = vld [vmem:[%s1 + $0x60] sm:$0xff]
    %v62 = vld [vmem:[%s1 + $0x68] sm:$0xff]
    %v63 = vld [vmem:[%s1 + $0x70] sm:$0xff]
    %v64 = vld [vmem:[%s1 + $0x78] sm:$0xff]
    %v65 = vld [vmem:[%s1 + $0x80] sm:$0xff]
    %v66 = vld [vmem:[%s1 + $0x88] sm:$0xff]
    %v67 = vld [vmem:[%s1 + $0x90] sm:$0xff]
    %v68 = vld [vmem:[%s1 + $0x98] sm:$0xff]
    %v69 = vld [vmem:[%s1 + $0xa0] sm:$0xff]
    %v70 = vld [vmem:[%s1 + $0xa8] sm:$0xff]
    %v71 = vld [vmem:[%s1 + $0xb0] sm:$0xff]
    %v72 = vld [vmem:[%s1 + $0xb8] sm:$0xff]
    %v73 = vld [vmem:[%s1 + $0xc0] sm:$0xff]
    %v74 = vld [vmem:[%s1 + $0xc8] sm:$0xff]
    %v75 = vld [vmem:[%s1 + $0xd0] sm:$0xff]
    %v76 = vld [vmem:[%s1 + $0xd8] sm:$0xff]
    %v77 = vld [vmem:[%s1 + $0xe0] sm:$0xff]
    %v78 = vld [vmem:[%s1 + $0xe8] sm:$0xff]
    %v79 = vld [vmem:[%s1 + $0xf0] sm:$0xff]
    %v80 = vld [vmem:[%s1 + $0xf8] sm:$0xff]
    %v81 = vld [vmem:[%s1 + $0x100] sm:$0xff]
    %v82 = vld [vmem:[%s1 + $0x108] sm:$0xff]
    %v83 = vld [vmem:[%s1 + $0x110] sm:$0xff]
    %v84 = vld [vmem:[%s1 + $0x118] sm:$0xff]
    %v85 = vld [vmem:[%s1 + $0x120] sm:$0xff]
    %v86 = vld [vmem:[%s1 + $0x128] sm:$0xff]
    %v87 = vld [vmem:[%s1 + $0x130] sm:$0xff]
    %v88 = vld [vmem:[%s1 + $0x138] sm:$0xff]
    %v89 = vld [vmem:[%s1 + $0x140] sm:$0xff]
    %v90 = vld [vmem:[%s1 + $0x148] sm:$0xff]
    %v91 = vld [vmem:[%s1 + $0x150] sm:$0xff]
    %v92 = vld [vmem:[%s1 + $0x158] sm:$0xff]
    %v93 = vld [vmem:[%s1 + $0x160] sm:$0xff]
    %v94 = vld [vmem:[%s1 + $0x168] sm:$0xff]
    %v95 = vld [vmem:[%s1 + $0x170] sm:$0xff]
    %v96 = vld [vmem:[%s1 + $0x178] sm:$0xff]
    %v97 = vld [vmem:[%s1 + $0x180] sm:$0xff]
    %v98 = vld [vmem:[%s1 + $0x188] sm:$0xff]
    %v99 = vld [vmem:[%s1 + $0x190] sm:$0xff]
    %v100 = vld [vmem:[%s1 + $0x198] sm:$0xff]
    %v101 = vld [vmem:[%s1 + $0x1a0] sm:$0xff]
    %v102 = vld [vmem:[%s1 + $0x1a8] sm:$0xff]
    %v103 = vld [vmem:[%s1 + $0x1b0] sm:$0xff]
    %v104 = vld [vmem:[%s1 + $0x1b8] sm:$0xff]
    %v105 = vld [vmem:[%s1 + $0x1c0] sm:$0xff]
    %v106 = vld [vmem:[%s1 + $0x1c8] sm:$0xff]
    %v107 = vld [vmem:[%s1 + $0x1d0] sm:$0xff]
    %v108 = vld [vmem:[%s1 + $0x1d8] sm:$0xff]
    %v109 = vld [vmem:[%s1 + $0x1e0] sm:$0xff]
    %v110 = vld [vmem:[%s1 + $0x1e8] sm:$0xff]
    %v111 = vld [vmem:[%s1 + $0x1f0] sm:$0xff]
    %v112 = vld [vmem:[%s1 + $0x1f8] sm:$0xff]
    %v113 = vld [vmem:[%s1 + $0x200] sm:$0xff]
    %v114 = vld [vmem:[%s1 + $0x208] sm:$0xff]
    %v115 = vld [vmem:[%s1 + $0x210] sm:$0xff]
    %v116 = vld [vmem:[%s1 + $0x218] sm:$0xff]
    %v117 = vld [vmem:[%s1 + $0x220] sm:$0xff]
    %v118 = vld [vmem:[%s1 + $0x228] sm:$0xff]
    %v119 = vld [vmem:[%s1 + $0x230] sm:$0xff]
    %v120 = vld [vmem:[%s1 + $0x238] sm:$0xff]
    %v121 = vld [vmem:[%s1 + $0x240] sm:$0xff]
    %v122 = vld [vmem:[%s1 + $0x248] sm:$0xff]
    %v123 = vld [vmem:[%s1 + $0x250] sm:$0xff]
    %v124 = vld [vmem:[%s1 + $0x258] sm:$0xff]
    %v125 = vld [vmem:[%s1 + $0x260] sm:$0xff]
    %v126 = vld [vmem:[%s1 + $0x268] sm:$0xff]
    %v127 = vld [vmem:[%s1 + $0x270] sm:$0xff]
    %v128 = vld [vmem:[%s1 + $0x278] sm:$0xff]
    %v129 = vld [vmem:[%s1 + $0x280] sm:$0xff]
    %v130 = vld [vmem:[%s1 + $0x288] sm:$0xff]
    %v131 = vld [vmem:[%s1 + $0x290] sm:$0xff]
    %v132 = vld [vmem:[%s1 + $0x298] sm:$0xff]
    %v133 = vld [vmem:[%s1 + $0x2a0] sm:$0xff]
    %v134 = vld [vmem:[%s1 + $0x2a8] sm:$0xff]
    %v135 = vld [vmem:[%s1 + $0x2b0] sm:$0xff]
    %v136 = vld [vmem:[%s1 + $0x2b8] sm:$0xff]
    %v137 = vld [vmem:[%s1 + $0x2c0] sm:$0xff]
    %v138 = vld [vmem:[%s1 + $0x2c8] sm:$0xff]
    %v139 = vld [vmem:[%s1 + $0x2d0] sm:$0xff]
    %v140 = vld [vmem:[%s1 + $0x2d8] sm:$0xff]
    %v141 = vld [vmem:[%s1 + $0x2e0] sm:$0xff]
    %v142 = vld [vmem:[%s1 + $0x2e8] sm:$0xff]
    %v143 = vld [vmem:[%s1 + $0x2f0] sm:$0xff]
    %v144 = vld [vmem:[%s1 + $0x2f8] sm:$0xff]
    %v145 = vld [vmem:[%s1 + $0x300] sm:$0xff]
    %v146 = vld [vmem:[%s1 + $0x308] sm:$0xff]
    %v147 = vld [vmem:[%s1 + $0x310] sm:$0xff]
    %v148 = vld [vmem:[%s1 + $0x318] sm:$0xff]
    %v149 = vld [vmem:[%s1 + $0x320] sm:$0xff]
    %v150 = vld [vmem:[%s1 + $0x328] sm:$0xff]
    %v151 = vld [vmem:[%s1 + $0x330] sm:$0xff]
    %v152 = vld [vmem:[%s1 + $0x338] sm:$0xff]
    %v153 = vld [vmem:[%s1 + $0x340] sm:$0xff]
    %v154 = vld [vmem:[%s1 + $0x348] sm:$0xff]
    %v155 = vld [vmem:[%s1 + $0x350] sm:$0xff]
    %v156 = vld [vmem:[%s1 + $0x358] sm:$0xff]
    %v157 = vld [vmem:[%s1 + $0x360] sm:$0xff]
    %v158 = vld [vmem:[%s1 + $0x368] sm:$0xff]
    %v159 = vld [vmem:[%s1 + $0x370] sm:$0xff]
    %v160 = vld [vmem:[%s1 + $0x378] sm:$0xff]
    %v161 = vld [vmem:[%s1 + $0x380] sm:$0xff]
    %v162 = vld [vmem:[%s1 + $0x388] sm:$0xff]
    %v163 = vld [vmem:[%s1 + $0x390] sm:$0xff]
    %v164 = vld [vmem:[%s1 + $0x398] sm:$0xff]
    %v165 = vld [vmem:[%s1 + $0x3a0] sm:$0xff]
    %v166 = vld [vmem:[%s1 + $0x3a8] sm:$0xff]
    %v167 = vld [vmem:[%s1 + $0x3b0] sm:$0xff]
    %v168 = vld [vmem:[%s1 + $0x3b8] sm:$0xff]
    %v169 = vld [vmem:[%s1 + $0x3c0] sm:$0xff]
    %v170 = vld [vmem:[%s1 + $0x3c8] sm:$0xff]
    %v171 = vld [vmem:[%s1 + $0x3d0] sm:$0xff]
    %v172 = vld [vmem:[%s1 + $0x3d8] sm:$0xff]
    %v173 = vld [vmem:[%s1 + $0x3e0] sm:$0xff]
    %v174 = vld [vmem:[%s1 + $0x3e8] sm:$0xff]
    %v175 = vld [vmem:[%s1 + $0x3f0] sm:$0xff]
    %v176 = vld [vmem:[%s1 + $0x3f8] sm:$0xff]
    %v177 = vld [vmem:[%s1 + $0x400] sm:$0xff]
    %v178 = vld [vmem:[%s1 + $0x408] sm:$0xff]
    %v179 = vld [vmem:[%s1 + $0x410] sm:$0xff]
    %v180 = vld [vmem:[%s1 + $0x418] sm:$0xff]
    %v181 = vld [vmem:[%s1 + $0x420] sm:$0xff]
    %v182 = vld [vmem:[%s1 + $0x428] sm:$0xff]
    %v183 = vld [vmem:[%s1 + $0x430] sm:$0xff]
    %v184 = vld [vmem:[%s1 + $0x438] sm:$0xff]
    %v185 = vld [vmem:[%s1 + $0x440] sm:$0xff]
    %v186 = vld [vmem:[%s1 + $0x448] sm:$0xff]
    %v187 = vld [vmem:[%s1 + $0x450] sm:$0xff]
    %v188 = vld [vmem:[%s1 + $0x458] sm:$0xff]
    %v189 = vld [vmem:[%s1 + $0x460] sm:$0xff]
    %v190 = vld [vmem:[%s1 + $0x468] sm:$0xff]
    %v191 = vld [vmem:[%s1 + $0x470] sm:$0xff]
    %v192 = vld [vmem:[%s1 + $0x478] sm:$0xff]
    %v193 = vld [vmem:[%s1 + $0x480] sm:$0xff]
    %v194 = vld [vmem:[%s1 + $0x488] sm:$0xff]
    %v195 = vld [vmem:[%s1 + $0x490] sm:$0xff]
    %v196 = vld [vmem:[%s1 + $0x498] sm:$0xff]
    %v197 = vld [vmem:[%s1 + $0x4a0] sm:$0xff]
    %v198 = vld [vmem:[%s1 + $0x4a8] sm:$0xff]
    %v199 = vld [vmem:[%s1 + $0x4b0] sm:$0xff]
    %v200 = vld [vmem:[%s1 + $0x4b8] sm:$0xff]
    %v201 = vld [vmem:[%s1 + $0x4c0] sm:$0xff]
    %v202 = vld [vmem:[%s1 + $0x4c8] sm:$0xff]
    %v203 = vld [vmem:[%s1 + $0x4d0] sm:$0xff]
    %v204 = vld [vmem:[%s1 + $0x4d8] sm:$0xff]
    %v205 = vld [vmem:[%s1 + $0x4e0] sm:$0xff]
    %v206 = vld [vmem:[%s1 + $0x4e8] sm:$0xff]
    %v207 = vld [vmem:[%s1 + $0x4f0] sm:$0xff]
    %v208 = vld [vmem:[%s1 + $0x4f8] sm:$0xff]
    %v209 = vld [vmem:[%s1 + $0x500] sm:$0xff]
    %v210 = vld [vmem:[%s1 + $0x508] sm:$0xff]
    %v211 = vld [vmem:[%s1 + $0x510] sm:$0xff]
    %v212 = vld [vmem:[%s1 + $0x518] sm:$0xff]
    %v213 = vld [vmem:[%s1 + $0x520] sm:$0xff]
    %v214 = vld [vmem:[%s1 + $0x528] sm:$0xff]
    %v215 = vld [vmem:[%s1 + $0x530] sm:$0xff]
    %v216 = vld [vmem:[%s1 + $0x538] sm:$0xff]
    %v217 = vld [vmem:[%s1 + $0x540] sm:$0xff]
    %v218 = vld [vmem:[%s1 + $0x548] sm:$0xff]
    %v219 = vld [vmem:[%s1 + $0x550] sm:$0xff]
    %v220 = vld [vmem:[%s1 + $0x558] sm:$0xff]
    %v221 = vld [vmem:[%s1 + $0x560] sm:$0xff]
    %v222 = vld [vmem:[%s1 + $0x568] sm:$0xff]
    %v223 = vld [vmem:[%s1 + $0x570] sm:$0xff]
    %v224 = vld [vmem:[%s1 + $0x578] sm:$0xff]
    %v225 = vld [vmem:[%s1 + $0x580] sm:$0xff]
    %v226 = vld [vmem:[%s1 + $0x588] sm:$0xff]
    %v227 = vld [vmem:[%s1 + $0x590] sm:$0xff]
    %v228 = vld [vmem:[%s1 + $0x598] sm:$0xff]
    %v229 = vld [vmem:[%s1 + $0x5a0] sm:$0xff]
    %v230 = vld [vmem:[%s1 + $0x5a8] sm:$0xff]
    %v231 = vld [vmem:[%s1 + $0x5b0] sm:$0xff]
    %v232 = vld [vmem:[%s1 + $0x5b8] sm:$0xff]
    %v233 = vld [vmem:[%s1 + $0x5c0] sm:$0xff]
    %v234 = vld [vmem:[%s1 + $0x5c8] sm:$0xff]
    %v235 = vld [vmem:[%s1 + $0x5d0] sm:$0xff]
    %v236 = vld [vmem:[%s1 + $0x5d8] sm:$0xff]
    %v237 = vld [vmem:[%s1 + $0x5e0] sm:$0xff]
    %v238 = vld [vmem:[%s1 + $0x5e8] sm:$0xff]
    %v239 = vld [vmem:[%s1 + $0x5f0] sm:$0xff]
    %v240 = vld [vmem:[%s1 + $0x5f8] sm:$0xff]
    %v241 = vld [vmem:[%s1 + $0x600] sm:$0xff]
    %v242 = vld [vmem:[%s1 + $0x608] sm:$0xff]
    %v243 = vld [vmem:[%s1 + $0x610] sm:$0xff]
    %v244 = vld [vmem:[%s1 + $0x618] sm:$0xff]
    %v245 = vld [vmem:[%s1 + $0x620] sm:$0xff]
    %v246 = vld [vmem:[%s1 + $0x628] sm:$0xff]
    %v247 = vld [vmem:[%s1 + $0x630] sm:$0xff]
    %v248 = vld [vmem:[%s1 + $0x638] sm:$0xff]
    %v249 = vld [vmem:[%s1 + $0x640] sm:$0xff]
    %v250 = vld [vmem:[%s1 + $0x648] sm:$0xff]
    %v251 = vld [vmem:[%s1 + $0x650] sm:$0xff]
    %v252 = vld [vmem:[%s1 + $0x658] sm:$0xff]
    %v253 = vld [vmem:[%s1 + $0x660] sm:$0xff]
    %v254 = vld [vmem:[%s1 + $0x668] sm:$0xff]
    %v255 = vld [vmem:[%s1 + $0x670] sm:$0xff]
    %v256 = vld [vmem:[%s1 + $0x678] sm:$0xff]
    %v257 = vld [vmem:[%s1 + $0x680] sm:$0xff]
    %v258 = vld [vmem:[%s1 + $0x688] sm:$0xff]
    %v259 = vld [vmem:[%s1 + $0x690] sm:$0xff]
    %v260 = vld [vmem:[%s1 + $0x698] sm:$0xff]
    %v261 = vld [vmem:[%s1 + $0x6a0] sm:$0xff]
    %v262 = vld [vmem:[%s1 + $0x6a8] sm:$0xff]
    %v263 = vld [vmem:[%s1 + $0x6b0] sm:$0xff]
    %v264 = vld [vmem:[%s1 + $0x6b8] sm:$0xff]
    %v265 = vld [vmem:[%s4] sm:$0x1]
    %v266 = vperm.slane %v265, 0
    %vm267 = vcmask 523264
    %v269 = vsel %vm267, %v34, 0
    %v272 = vsel %vm267, %v48, 0
    %274 = vmatpush.msra.mxu0 %v64
    %275 = vmatpush.msra.mxu0 %v63
    %276 = vmatpush.msra.mxu0 %v62
    %277 = vmatpush.msra.mxu0 %v61
    %278 = vmatpush.msra.mxu0 %v60
    %279 = vmatpush.msra.mxu0 %v59
    %280 = vmatpush.msra.mxu0 %v58
    %281 = vmatpush.msra.mxu0 %v57
    %282 = vmatpush.msra.mxu0 %v56
    %283 = vmatpush.msra.mxu0 %v55
    %284 = vmatpush.msra.mxu0 %v54
    %285 = vmatpush.msra.mxu0 %v53
    %286 = vmatpush.msra.mxu0 %v52
    %287 = vmatpush.msra.mxu0 %v51
    %288 = vmatpush.msra.mxu0 %v50
    %289 = vmatpush.msra.mxu0 %v49
    %290 = vmatmul.f32.gmra.mxu0 %v21
    %v291 = vpop.f32.mrf.mxu0
    %v292 = vadd.f32 %v266, %v291
    %293 = vmatmul.f32.gmra.mxu0 %v35
    %v294 = vpop.f32.mrf.mxu0
    %v295 = vadd.f32 %v266, %v294
    %296 = vdwg.mxu0
    %297 = vmatpush.msra.mxu0 %v80
    %298 = vmatpush.msra.mxu0 %v79
    %299 = vmatpush.msra.mxu0 %v78
    %300 = vmatpush.msra.mxu0 %v77
    %301 = vmatpush.msra.mxu0 %v76
    %302 = vmatpush.msra.mxu0 %v75
    %303 = vmatpush.msra.mxu0 %v74
    %304 = vmatpush.msra.mxu0 %v73
    %305 = vmatpush.msra.mxu0 %v72
    %306 = vmatpush.msra.mxu0 %v71
    %307 = vmatpush.msra.mxu0 %v70
    %308 = vmatpush.msra.mxu0 %v69
    %309 = vmatpush.msra.mxu0 %v68
    %310 = vmatpush.msra.mxu0 %v67
    %311 = vmatpush.msra.mxu0 %v66
    %312 = vmatpush.msra.mxu0 %v65
    %313 = vmatmul.f32.gmra.mxu0 %v22
    %v314 = vpop.f32.mrf.mxu0
    %v315 = vadd.f32 %v292, %v314
    %316 = vmatmul.f32.gmra.mxu0 %v36
    %v317 = vpop.f32.mrf.mxu0
    %v318 = vadd.f32 %v295, %v317
    %319 = vdwg.mxu0
    %320 = vmatpush.msra.mxu0 %v96
    %321 = vmatpush.msra.mxu0 %v95
    %322 = vmatpush.msra.mxu0 %v94
    %323 = vmatpush.msra.mxu0 %v93
    %324 = vmatpush.msra.mxu0 %v92
    %325 = vmatpush.msra.mxu0 %v91
    %326 = vmatpush.msra.mxu0 %v90
    %327 = vmatpush.msra.mxu0 %v89
    %328 = vmatpush.msra.mxu0 %v88
    %329 = vmatpush.msra.mxu0 %v87
    %330 = vmatpush.msra.mxu0 %v86
    %331 = vmatpush.msra.mxu0 %v85
    %332 = vmatpush.msra.mxu0 %v84
    %333 = vmatpush.msra.mxu0 %v83
    %334 = vmatpush.msra.mxu0 %v82
    %335 = vmatpush.msra.mxu0 %v81
    %336 = vmatmul.f32.gmra.mxu0 %v23
    %v337 = vpop.f32.mrf.mxu0
    %v338 = vadd.f32 %v315, %v337
    %339 = vmatmul.f32.gmra.mxu0 %v37
    %v340 = vpop.f32.mrf.mxu0
    %v341 = vadd.f32 %v318, %v340
    %342 = vdwg.mxu0
    %343 = vmatpush.msra.mxu0 %v112
    %344 = vmatpush.msra.mxu0 %v111
    %345 = vmatpush.msra.mxu0 %v110
    %346 = vmatpush.msra.mxu0 %v109
    %347 = vmatpush.msra.mxu0 %v108
    %348 = vmatpush.msra.mxu0 %v107
    %349 = vmatpush.msra.mxu0 %v106
    %350 = vmatpush.msra.mxu0 %v105
    %351 = vmatpush.msra.mxu0 %v104
    %352 = vmatpush.msra.mxu0 %v103
    %353 = vmatpush.msra.mxu0 %v102
    %354 = vmatpush.msra.mxu0 %v101
    %355 = vmatpush.msra.mxu0 %v100
    %356 = vmatpush.msra.mxu0 %v99
    %357 = vmatpush.msra.mxu0 %v98
    %358 = vmatpush.msra.mxu0 %v97
    %359 = vmatmul.f32.gmra.mxu0 %v24
    %v360 = vpop.f32.mrf.mxu0
    %v361 = vadd.f32 %v338, %v360
    %362 = vmatmul.f32.gmra.mxu0 %v38
    %v363 = vpop.f32.mrf.mxu0
    %v364 = vadd.f32 %v341, %v363
    %365 = vdwg.mxu0
    %366 = vmatpush.msra.mxu0 %v128
    %367 = vmatpush.msra.mxu0 %v127
    %368 = vmatpush.msra.mxu0 %v126
    %369 = vmatpush.msra.mxu0 %v125
    %370 = vmatpush.msra.mxu0 %v124
    %371 = vmatpush.msra.mxu0 %v123
    %372 = vmatpush.msra.mxu0 %v122
    %373 = vmatpush.msra.mxu0 %v121
    %374 = vmatpush.msra.mxu0 %v120
    %375 = vmatpush.msra.mxu0 %v119
    %376 = vmatpush.msra.mxu0 %v118
    %377 = vmatpush.msra.mxu0 %v117
    %378 = vmatpush.msra.mxu0 %v116
    %379 = vmatpush.msra.mxu0 %v115
    %380 = vmatpush.msra.mxu0 %v114
    %381 = vmatpush.msra.mxu0 %v113
    %382 = vmatmul.f32.gmra.mxu0 %v25
    %v383 = vpop.f32.mrf.mxu0
    %v384 = vadd.f32 %v361, %v383
    %385 = vmatmul.f32.gmra.mxu0 %v39
    %v386 = vpop.f32.mrf.mxu0
    %v387 = vadd.f32 %v364, %v386
    %388 = vdwg.mxu0
    %389 = vmatpush.msra.mxu0 %v144
    %390 = vmatpush.msra.mxu0 %v143
    %391 = vmatpush.msra.mxu0 %v142
    %392 = vmatpush.msra.mxu0 %v141
    %393 = vmatpush.msra.mxu0 %v140
    %394 = vmatpush.msra.mxu0 %v139
    %395 = vmatpush.msra.mxu0 %v138
    %396 = vmatpush.msra.mxu0 %v137
    %397 = vmatpush.msra.mxu0 %v136
    %398 = vmatpush.msra.mxu0 %v135
    %399 = vmatpush.msra.mxu0 %v134
    %400 = vmatpush.msra.mxu0 %v133
    %401 = vmatpush.msra.mxu0 %v132
    %402 = vmatpush.msra.mxu0 %v131
    %403 = vmatpush.msra.mxu0 %v130
    %404 = vmatpush.msra.mxu0 %v129
    %405 = vmatmul.f32.gmra.mxu0 %v26
    %v406 = vpop.f32.mrf.mxu0
    %v407 = vadd.f32 %v384, %v406
    %408 = vmatmul.f32.gmra.mxu0 %v40
    %v409 = vpop.f32.mrf.mxu0
    %v410 = vadd.f32 %v387, %v409
    %411 = vdwg.mxu0
    %412 = vmatpush.msra.mxu0 %v160
    %413 = vmatpush.msra.mxu0 %v159
    %414 = vmatpush.msra.mxu0 %v158
    %415 = vmatpush.msra.mxu0 %v157
    %416 = vmatpush.msra.mxu0 %v156
    %417 = vmatpush.msra.mxu0 %v155
    %418 = vmatpush.msra.mxu0 %v154
    %419 = vmatpush.msra.mxu0 %v153
    %420 = vmatpush.msra.mxu0 %v152
    %421 = vmatpush.msra.mxu0 %v151
    %422 = vmatpush.msra.mxu0 %v150
    %423 = vmatpush.msra.mxu0 %v149
    %424 = vmatpush.msra.mxu0 %v148
    %425 = vmatpush.msra.mxu0 %v147
    %426 = vmatpush.msra.mxu0 %v146
    %427 = vmatpush.msra.mxu0 %v145
    %428 = vmatmul.f32.gmra.mxu0 %v27
    %v429 = vpop.f32.mrf.mxu0
    %v430 = vadd.f32 %v407, %v429
    %431 = vmatmul.f32.gmra.mxu0 %v41
    %v432 = vpop.f32.mrf.mxu0
    %v433 = vadd.f32 %v410, %v432
    %434 = vdwg.mxu0
    %435 = vmatpush.msra.mxu0 %v176
    %436 = vmatpush.msra.mxu0 %v175
    %437 = vmatpush.msra.mxu0 %v174
    %438 = vmatpush.msra.mxu0 %v173
    %439 = vmatpush.msra.mxu0 %v172
    %440 = vmatpush.msra.mxu0 %v171
    %441 = vmatpush.msra.mxu0 %v170
    %442 = vmatpush.msra.mxu0 %v169
    %443 = vmatpush.msra.mxu0 %v168
    %444 = vmatpush.msra.mxu0 %v167
    %445 = vmatpush.msra.mxu0 %v166
    %446 = vmatpush.msra.mxu0 %v165
    %447 = vmatpush.msra.mxu0 %v164
    %448 = vmatpush.msra.mxu0 %v163
    %449 = vmatpush.msra.mxu0 %v162
    %450 = vmatpush.msra.mxu0 %v161
    %451 = vmatmul.f32.gmra.mxu0 %v28
    %v452 = vpop.f32.mrf.mxu0
    %v453 = vadd.f32 %v430, %v452
    %454 = vmatmul.f32.gmra.mxu0 %v42
    %v455 = vpop.f32.mrf.mxu0
    %v456 = vadd.f32 %v433, %v455
    %457 = vdwg.mxu0
    %458 = vmatpush.msra.mxu0 %v192
    %459 = vmatpush.msra.mxu0 %v191
    %460 = vmatpush.msra.mxu0 %v190
    %461 = vmatpush.msra.mxu0 %v189
    %462 = vmatpush.msra.mxu0 %v188
    %463 = vmatpush.msra.mxu0 %v187
    %464 = vmatpush.msra.mxu0 %v186
    %465 = vmatpush.msra.mxu0 %v185
    %466 = vmatpush.msra.mxu0 %v184
    %467 = vmatpush.msra.mxu0 %v183
    %468 = vmatpush.msra.mxu0 %v182
    %469 = vmatpush.msra.mxu0 %v181
    %470 = vmatpush.msra.mxu0 %v180
    %471 = vmatpush.msra.mxu0 %v179
    %472 = vmatpush.msra.mxu0 %v178
    %473 = vmatpush.msra.mxu0 %v177
    %474 = vmatmul.f32.gmra.mxu0 %v29
    %v475 = vpop.f32.mrf.mxu0
    %v476 = vadd.f32 %v453, %v475
    %477 = vmatmul.f32.gmra.mxu0 %v43
    %v478 = vpop.f32.mrf.mxu0
    %v479 = vadd.f32 %v456, %v478
    %480 = vdwg.mxu0
    %481 = vmatpush.msra.mxu0 %v208
    %482 = vmatpush.msra.mxu0 %v207
    %483 = vmatpush.msra.mxu0 %v206
    %484 = vmatpush.msra.mxu0 %v205
    %485 = vmatpush.msra.mxu0 %v204
    %486 = vmatpush.msra.mxu0 %v203
    %487 = vmatpush.msra.mxu0 %v202
    %488 = vmatpush.msra.mxu0 %v201
    %489 = vmatpush.msra.mxu0 %v200
    %490 = vmatpush.msra.mxu0 %v199
    %491 = vmatpush.msra.mxu0 %v198
    %492 = vmatpush.msra.mxu0 %v197
    %493 = vmatpush.msra.mxu0 %v196
    %494 = vmatpush.msra.mxu0 %v195
    %495 = vmatpush.msra.mxu0 %v194
    %496 = vmatpush.msra.mxu0 %v193
    %497 = vmatmul.f32.gmra.mxu0 %v30
    %v498 = vpop.f32.mrf.mxu0
    %v499 = vadd.f32 %v476, %v498
    %500 = vmatmul.f32.gmra.mxu0 %v44
    %v501 = vpop.f32.mrf.mxu0
    %v502 = vadd.f32 %v479, %v501
    %503 = vdwg.mxu0
    %504 = vmatpush.msra.mxu0 %v224
    %505 = vmatpush.msra.mxu0 %v223
    %506 = vmatpush.msra.mxu0 %v222
    %507 = vmatpush.msra.mxu0 %v221
    %508 = vmatpush.msra.mxu0 %v220
    %509 = vmatpush.msra.mxu0 %v219
    %510 = vmatpush.msra.mxu0 %v218
    %511 = vmatpush.msra.mxu0 %v217
    %512 = vmatpush.msra.mxu0 %v216
    %513 = vmatpush.msra.mxu0 %v215
    %514 = vmatpush.msra.mxu0 %v214
    %515 = vmatpush.msra.mxu0 %v213
    %516 = vmatpush.msra.mxu0 %v212
    %517 = vmatpush.msra.mxu0 %v211
    %518 = vmatpush.msra.mxu0 %v210
    %519 = vmatpush.msra.mxu0 %v209
    %520 = vmatmul.f32.gmra.mxu0 %v31
    %v521 = vpop.f32.mrf.mxu0
    %v522 = vadd.f32 %v499, %v521
    %523 = vmatmul.f32.gmra.mxu0 %v45
    %v524 = vpop.f32.mrf.mxu0
    %v525 = vadd.f32 %v502, %v524
    %526 = vdwg.mxu0
    %527 = vmatpush.msra.mxu0 %v240
    %528 = vmatpush.msra.mxu0 %v239
    %529 = vmatpush.msra.mxu0 %v238
    %530 = vmatpush.msra.mxu0 %v237
    %531 = vmatpush.msra.mxu0 %v236
    %532 = vmatpush.msra.mxu0 %v235
    %533 = vmatpush.msra.mxu0 %v234
    %534 = vmatpush.msra.mxu0 %v233
    %535 = vmatpush.msra.mxu0 %v232
    %536 = vmatpush.msra.mxu0 %v231
    %537 = vmatpush.msra.mxu0 %v230
    %538 = vmatpush.msra.mxu0 %v229
    %539 = vmatpush.msra.mxu0 %v228
    %540 = vmatpush.msra.mxu0 %v227
    %541 = vmatpush.msra.mxu0 %v226
    %542 = vmatpush.msra.mxu0 %v225
    %543 = vmatmul.f32.gmra.mxu0 %v32
    %v544 = vpop.f32.mrf.mxu0
    %v545 = vadd.f32 %v522, %v544
    %546 = vmatmul.f32.gmra.mxu0 %v46
    %v547 = vpop.f32.mrf.mxu0
    %v548 = vadd.f32 %v525, %v547
    %549 = vdwg.mxu0
    %550 = vmatpush.msra.mxu0 %v256
    %551 = vmatpush.msra.mxu0 %v255
    %552 = vmatpush.msra.mxu0 %v254
    %553 = vmatpush.msra.mxu0 %v253
    %554 = vmatpush.msra.mxu0 %v252
    %555 = vmatpush.msra.mxu0 %v251
    %556 = vmatpush.msra.mxu0 %v250
    %557 = vmatpush.msra.mxu0 %v249
    %558 = vmatpush.msra.mxu0 %v248
    %559 = vmatpush.msra.mxu0 %v247
    %560 = vmatpush.msra.mxu0 %v246
    %561 = vmatpush.msra.mxu0 %v245
    %562 = vmatpush.msra.mxu0 %v244
    %563 = vmatpush.msra.mxu0 %v243
    %564 = vmatpush.msra.mxu0 %v242
    %565 = vmatpush.msra.mxu0 %v241
    %566 = vmatmul.f32.gmra.mxu0 %v33
    %v567 = vpop.f32.mrf.mxu0
    %v568 = vadd.f32 %v545, %v567
    %569 = vmatmul.f32.gmra.mxu0 %v47
    %v570 = vpop.f32.mrf.mxu0
    %v571 = vadd.f32 %v548, %v570
    %572 = vdwg.mxu0
    %573 = vmatpush.msra.mxu0 0.0
    %574 = vmatpush.msra.mxu0 0.0
    %575 = vmatpush.msra.mxu0 0.0
    %576 = vmatpush.msra.mxu0 0.0
    %577 = vmatpush.msra.mxu0 0.0
    %578 = vmatpush.msra.mxu0 0.0
    %579 = vmatpush.msra.mxu0 0.0
    %580 = vmatpush.msra.mxu0 0.0
    %581 = vmatpush.msra.mxu0 %v264
    %582 = vmatpush.msra.mxu0 %v263
    %583 = vmatpush.msra.mxu0 %v262
    %584 = vmatpush.msra.mxu0 %v261
    %585 = vmatpush.msra.mxu0 %v260
    %586 = vmatpush.msra.mxu0 %v259
    %587 = vmatpush.msra.mxu0 %v258
    %588 = vmatpush.msra.mxu0 %v257
    %589 = vmatmul.f32.gmra.mxu0 %v269
    %v590 = vpop.f32.mrf.mxu0
    %v591 = vadd.f32 %v568, %v590
    %592 = vmatmul.f32.gmra.mxu0 %v272
    %v593 = vpop.f32.mrf.mxu0
    %v594 = vadd.f32 %v571, %v593
    %595 = vdwg.mxu0
    %v596 = vmax.f32 %v591, 0.0
    %v597 = vmax.f32 %v594, 0.0
    %v598 = vld [vmem:[%s2] sm:$0xff]
    %v599 = vld [vmem:[%s2 + $0x8] sm:$0xff]
    %v600 = vld [vmem:[%s2 + $0x10] sm:$0xff]
    %v601 = vld [vmem:[%s2 + $0x18] sm:$0xff]
    %v602 = vld [vmem:[%s2 + $0x20] sm:$0xff]
    %v603 = vld [vmem:[%s2 + $0x28] sm:$0xff]
    %v604 = vld [vmem:[%s2 + $0x30] sm:$0xff]
    %v605 = vld [vmem:[%s2 + $0x38] sm:$0xff]
    %v606 = vld [vmem:[%s2 + $0x40] sm:$0xff]
    %v607 = vld [vmem:[%s2 + $0x48] sm:$0xff]
    %v608 = vld [vmem:[%s2 + $0x50] sm:$0xff]
    %v609 = vld [vmem:[%s2 + $0x58] sm:$0xff]
    %v610 = vld [vmem:[%s4 + $0x1] sm:$0x1]
    %v611 = vperm.slane %v610, 0
    %vm612 = vcmask 785408
    %v614 = vsel %vm612, %v596, 0
    %v617 = vsel %vm612, %v597, 0
    %619 = vmatpush.msra.mxu0 0.0
    %620 = vmatpush.msra.mxu0 0.0
    %621 = vmatpush.msra.mxu0 0.0
    %622 = vmatpush.msra.mxu0 0.0
    %623 = vmatpush.msra.mxu0 %v609
    %624 = vmatpush.msra.mxu0 %v608
    %625 = vmatpush.msra.mxu0 %v607
    %626 = vmatpush.msra.mxu0 %v606
    %627 = vmatpush.msra.mxu0 %v605
    %628 = vmatpush.msra.mxu0 %v604
    %629 = vmatpush.msra.mxu0 %v603
    %630 = vmatpush.msra.mxu0 %v602
    %631 = vmatpush.msra.mxu0 %v601
    %632 = vmatpush.msra.mxu0 %v600
    %633 = vmatpush.msra.mxu0 %v599
    %634 = vmatpush.msra.mxu0 %v598
    %635 = vmatmul.f32.gmra.mxu0 %v614
    %v636 = vpop.f32.mrf.mxu0
    %v637 = vadd.f32 %v611, %v636
    %638 = vmatmul.f32.gmra.mxu0 %v617
    %v639 = vpop.f32.mrf.mxu0
    %v640 = vadd.f32 %v611, %v639
    %641 = vdwg.mxu0
    %v642 = vmax.f32 %v637, 0.0
    %v643 = vmax.f32 %v640, 0.0
    %v644 = vld [vmem:[%s3] sm:$0xff]
    %v645 = vld [vmem:[%s3 + $0x8] sm:$0xff]
    %v646 = vld [vmem:[%s3 + $0x10] sm:$0xff]
    %v647 = vld [vmem:[%s3 + $0x18] sm:$0xff]
    %v648 = vld [vmem:[%s3 + $0x20] sm:$0xff]
    %v649 = vld [vmem:[%s3 + $0x28] sm:$0xff]
    %v650 = vld [vmem:[%s3 + $0x30] sm:$0xff]
    %v651 = vld [vmem:[%s3 + $0x38] sm:$0xff]
    %v652 = vld [vmem:[%s3 + $0x40] sm:$0xff]
    %v653 = vld [vmem:[%s3 + $0x48] sm:$0xff]
    %v654 = vld [vmem:[%s3 + $0x50] sm:$0xff]
    %v655 = vld [vmem:[%s3 + $0x58] sm:$0xff]
    %v656 = vld [vmem:[%s3 + $0x60] sm:$0xff]
    %v657 = vld [vmem:[%s3 + $0x68] sm:$0xff]
    %v658 = vld [vmem:[%s3 + $0x70] sm:$0xff]
    %v659 = vld [vmem:[%s3 + $0x78] sm:$0xff]
    %v660 = vld [vmem:[%s4 + $0x2] sm:$0x1]
    %v661 = vperm.slane %v660, 0
    %662 = vmatpush.msra.mxu0 %v659
    %663 = vmatpush.msra.mxu0 %v658
    %664 = vmatpush.msra.mxu0 %v657
    %665 = vmatpush.msra.mxu0 %v656
    %666 = vmatpush.msra.mxu0 %v655
    %667 = vmatpush.msra.mxu0 %v654
    %668 = vmatpush.msra.mxu0 %v653
    %669 = vmatpush.msra.mxu0 %v652
    %670 = vmatpush.msra.mxu0 %v651
    %671 = vmatpush.msra.mxu0 %v650
    %672 = vmatpush.msra.mxu0 %v649
    %673 = vmatpush.msra.mxu0 %v648
    %674 = vmatpush.msra.mxu0 %v647
    %675 = vmatpush.msra.mxu0 %v646
    %676 = vmatpush.msra.mxu0 %v645
    %677 = vmatpush.msra.mxu0 %v644
    %678 = vmatmul.f32.gmra.mxu0 %v642
    %v679 = vpop.f32.mrf.mxu0
    %v680 = vadd.f32 %v661, %v679
    %681 = vmatmul.f32.gmra.mxu0 %v643
    %v682 = vpop.f32.mrf.mxu0
    %v683 = vadd.f32 %v661, %v682
    %684 = vdwg.mxu0
    %v685 = vmax.f32 %v680, 0.0
    %v686 = vmax.f32 %v683, 0.0
    %687 = vst.msk [vmem:[#allocation2] sm:$0xff] %vm267, %v685
    %688 = vst.msk [vmem:[#allocation2 + $0x8] sm:$0xff] %vm267, %v686
    // Predicated region
    $region22: #{localvoxelnet_forward.1} parent=1 // pred_check
      _
    $region23: #{localvoxelnet_forward.1} parent=1 // pred_check_branch
      %690 = sbr.rel (0) target = $region25
    $region24: #{localvoxelnet_forward.1} parent=1 // pred_region
      %692 = vsyncadd [#allocation3], 0
      %s693 = sshll.u32 [#allocation2], 4
      %s694 = int_to_ptr.vmem [resolvable:$true] %s693
      %s695 = sshll.u32 %s5, 4
      %s696 = int_to_ptr.hbm [resolvable:$true] %s695
      %701 = dma.vmem_to_hbm [thread:$0]  %s694, 256, %s696, [#allocation3], 128, 128, 8
    $region25: #{localvoxelnet_forward.1} parent=1 // pred_fallthru
      _
    // Predicated region
    $region26: #{localvoxelnet_forward.1} parent=1 // pred_check
      _
    $region27: #{localvoxelnet_forward.1} parent=1 // pred_check_branch
      %703 = sbr.rel (0) target = $region29
    $region28: #{localvoxelnet_forward.1} parent=1 // pred_region
      %705 = dma.done [#allocation3], 256
    $region29: #{localvoxelnet_forward.1} parent=1 // pred_fallthru
      _
    %706 = vsyncpa [#allocation3], 1

</llo_original>
